<compile_context>
chip_gen: v7x
topology: tpu7x:2x2x1
jax: 0.10.0
libtpu: 0.0.40
codegen_flags: <defaults>
</compile_context>

<pallas_src>
import jax
import jax.numpy as jnp
from jax.experimental import pallas as pl
from jax.experimental.pallas import tpu as pltpu

_LANE_WIDTHS = (512, 256, 128)       # lane-dense slab widths (multiples of 128)
_TARGET_TILE_BYTES = 2 << 20         # ~2 MiB tiles: near-roofline on v5e/v6e/v7x
_MIN_PALLAS_BYTES = 256 * 1024       # below this, let XLA fuse x * w
_SUBLANE = {4: 8, 2: 16, 1: 32}      # sublane multiple per dtype itemsize


def _round_up(a, b):
    return ((a + b - 1) // b) * b


def _scale_kernel(w_ref, x_ref, o_ref):
    # Linear(1, 1, bias=False) over a lane-dense slab: y = x * W[0, 0].
    # Scalar weight read from SMEM; elementwise mul on the VPU co-issues with
    # vld/vst, so the kernel is purely HBM-bandwidth bound.
    w = w_ref[0, 0]                                    # f32 scalar from SMEM
    o_ref[...] = (x_ref[...] * w).astype(o_ref.dtype)


def linear_no_bias(x, w, *, min_pallas_bytes=_MIN_PALLAS_BYTES):
    """y = x @ w.T for w of shape (1, 1): elementwise scale of the size-1 feature dim.

    x: (..., 1) array, w: (1, 1) array -> same shape as x.
    """
    orig_shape = x.shape
    n = x.size
    itemsize = x.dtype.itemsize
    nbytes = n * itemsize

    # Widest lane-dense column count that divides n exactly: the flat input
    # then reshapes (free, contiguous) to (rows, cols) with NO pad copy and
    # the output reshapes straight back with NO slice copy.
    cols = next((c for c in _LANE_WIDTHS if n % c == 0), None)

    if cols is None or n == 0 or nbytes < min_pallas_bytes:
        # XLA's fused x * w is already at HBM roofline with zero extra copies;
        # only lane-aligned sizes can beat/match it through the custom kernel.
        return x * w[0, 0]

    sub = _SUBLANE[itemsize]                  # dtype-aware sublane rounding
    rows = n // cols
    slab = x.reshape(rows, cols)              # contiguous reshape: no copy

    # ~2 MiB tiles, but keep >= 4 grid steps when the input allows it so both
    # v7x TensorCores get >= 2 tiles each and can pipeline DMA against compute.
    rows_target = max(sub, _TARGET_TILE_BYTES // (cols * itemsize))
    row_block = max(sub, min(rows_target, _round_up(pl.cdiv(rows, 4), sub)))
    grid = (pl.cdiv(rows, row_block),)        # ragged last block: OOB writes masked
    tile_bytes = row_block * cols * itemsize

    out = pl.pallas_call(
        _scale_kernel,
        out_shape=jax.ShapeDtypeStruct(slab.shape, slab.dtype),
        grid_spec=pltpu.PrefetchScalarGridSpec(
            num_scalar_prefetch=0,
            grid=grid,
            in_specs=[
                pl.BlockSpec(memory_space=pltpu.MemorySpace.SMEM),   # (1,1) weight
                pl.BlockSpec((row_block, cols), lambda i: (i, 0)),   # x slab tile
            ],
            out_specs=pl.BlockSpec((row_block, cols), lambda i: (i, 0)),
        ),
        compiler_params=pltpu.CompilerParams(
            # Independent row tiles: shard across TensorCores on megacore parts
            # (no-op on single-TC v5e/v6e, kept for portability).
            dimension_semantics=("parallel",),
            # Double-buffered in+out (4 tiles) + margin: fits v5e's 16 MiB
            # scoped default and leaves ample headroom on v7x's 64 MiB VMEM.
            vmem_limit_bytes=int(max(4 * tile_bytes + (2 << 20), 4 << 20)),
        ),
    )(w.astype(jnp.float32).reshape(1, 1), slab)

    return out.reshape(orig_shape)


if __name__ == "__main__":
    key = jax.random.PRNGKey(0)
    kw, kx1, kx2, kx3 = jax.random.split(key, 4)

    # PyTorch Linear(1, 1, bias=False) default init: U(-1, 1) since in_features = 1.
    w = jax.random.uniform(kw, (1, 1), dtype=jnp.float32, minval=-1.0, maxval=1.0)

    # Small input consistent with Linear(1, 1): goes through the fused-XLA fallback.
    x_small = jax.random.normal(kx1, (2, 4, 8, 1), dtype=jnp.float32)
    y_small = jax.block_until_ready(linear_no_bias(x_small, w))
    assert y_small.shape == x_small.shape
    assert jnp.allclose(y_small, x_small @ w.T, atol=1e-6, rtol=1e-6)

    # Lane-aligned input forced down the Pallas path: 35840 elements = a
    # (rows=70, cols=512) slab, row_block=24 -> grid of 3 with a ragged last
    # block.  No pad, no slice anywhere in the wrapper.
    x_pallas = jax.random.normal(kx2, (35840, 1), dtype=jnp.float32)
    y_pallas = jax.block_until_ready(linear_no_bias(x_pallas, w, min_pallas_bytes=0))
    assert y_pallas.shape == x_pallas.shape
    assert jnp.allclose(y_pallas, x_pallas @ w.T, atol=1e-6, rtol=1e-6)

    # Non-lane-aligned size: stays on the zero-copy XLA fallback by design.
    x_odd = jax.random.normal(kx3, (3000, 1), dtype=jnp.float32)
    y_odd = jax.block_until_ready(linear_no_bias(x_odd, w, min_pallas_bytes=0))
    assert jnp.allclose(y_odd, x_odd @ w.T, atol=1e-6, rtol=1e-6)

    print("KERNEL_OK")
</pallas_src>

<mosaic_0001>
module attributes {stable_mosaic.version = 11 : i64} {
  func.func @_scale_kernel(%arg0: i32, %arg1: memref<1x1xf32, #tpu.memory_space<smem>>, %arg2: memref<24x512xf32, #tpu.memory_space<vmem>>, %arg3: memref<24x512xf32, #tpu.memory_space<vmem>>) attributes {dimension_semantics = [#tpu.dimension_semantics<parallel>], iteration_bounds = array<i64: 3>, scalar_prefetch = 0 : i64, scratch_operands = 0 : i64, tpu.core_type = #tpu.core_type<tc>, window_params = [{transform_indices = @transform_0, window_bounds = array<i64: 1, 1>}, {transform_indices = @transform_1, window_bounds = array<i64: 24, 512>}, {transform_indices = @transform_2, window_bounds = array<i64: 24, 512>}]} {
    %c0 = arith.constant 0 : index
    %c0_0 = arith.constant 0 : index
    %0 = memref.load %arg1[%c0, %c0_0] : memref<1x1xf32, #tpu.memory_space<smem>>
    %c0_1 = arith.constant 0 : index
    %c0_2 = arith.constant 0 : index
    %1 = vector.load %arg2[%c0_1, %c0_2] : memref<24x512xf32, #tpu.memory_space<vmem>>, vector<24x512xf32>
    %2 = vector.broadcast %0 : f32 to vector<24x512xf32>
    %3 = arith.mulf %1, %2 : vector<24x512xf32>
    %c0_3 = arith.constant 0 : index
    %c0_4 = arith.constant 0 : index
    %4 = vector.load %arg3[%c0_3, %c0_4] : memref<24x512xf32, #tpu.memory_space<vmem>>, vector<24x512xf32>
    tpu.vector_store %arg3[%c0_3, %c0_4], %3 {strides = array<i32>} : memref<24x512xf32, #tpu.memory_space<vmem>>, vector<24x512xf32>,
    return
  }
  func.func @transform_0(%arg0: i32) -> (i32, i32) {
    %c0_i32 = arith.constant 0 : i32
    %c0_i32_0 = arith.constant 0 : i32
    %c0_i32_1 = arith.constant 0 : i32
    return %c0_i32, %c0_i32_0 : i32, i32
  }
  func.func @transform_1(%arg0: i32) -> (i32, i32) {
    %c0_i32 = arith.constant 0 : i32
    %c0_i32_0 = arith.constant 0 : i32
    return %arg0, %c0_i32 : i32, i32
  }
  func.func @transform_2(%arg0: i32) -> (i32, i32) {
    %c0_i32 = arith.constant 0 : i32
    %c0_i32_0 = arith.constant 0 : i32
    return %arg0, %c0_i32 : i32, i32
  }
}

</mosaic_0001>

<llo_original>
// kernel: tpu_custom_call.1
$region0: #{tpu_custom_call.1}
  #allocation0 [shape = 'u32[]', space=smem, size = 0x4, offset = 0x4, fixed_abs, tag = 'smem constant byte address 0x4 - core index']
  #allocation1 [shape = 'u32[144,128]{1,0:T(1,128)}', space=vmem, size = 0x12000, scoped, tag = 'internal scratch']
  #allocation2 [shape = 'f32[1,1]{1,0:T(1,128)S(6)}', space=smem, size = 0x200, scoped, tag = 'scoped memory for tpu_custom_call.1']
  %s0 = inlined_call_operand.<no memory space> [shape: f32[1,1], index: 0, kind: input, shape index: {}]
  %s1 = inlined_call_operand.hbm [shape: f32[70,512], index: 1, kind: input, shape index: {}]
  %s2 = inlined_call_operand.hbm [shape: f32[70,512], index: 2, kind: output, shape index: {}]
  %s3 = sld [smem:[#allocation0]]
  $region45: #{tpu_custom_call.1} parent=0
    _
  %s5 = ssub.s32 1, %s3
  %s6 = scalar_select 0, %s5, %s3
  %7 = sst [smem:[#allocation2]] %s0
  $region1: #{tpu_custom_call.1} parent=0
    #allocation3 [shape = 'u8[98304]{0}', space=vmem, size = 0x18000, scoped, tag = 'input window, operand 1']
    #allocation4 [shape = 's32[2]{0}', space=sflag, size = 0x8, scoped, tag = 'scoped memory for tpu_custom_call.1']
    #allocation5 [shape = 's32[2]{0}', space=sflag, size = 0x8, scoped, tag = 'scoped memory for tpu_custom_call.1']
    #allocation6 [shape = 'u8[98304]{0}', space=vmem, size = 0x18000, scoped, tag = 'output window, operand 0']
    %8 = vsyncpa [#allocation4], 0
    %s9 = scalar_lea.sflag [#allocation4], 1
    %10 = vsyncpa %s9, 0
    %11 = vsyncpa [#allocation5], 0
    %s12 = scalar_lea.sflag [#allocation5], 1
    %13 = vsyncpa %s12, 0
    loop: start=0, step=1, limit=5
    $region2: #{tpu_custom_call.1} parent=1 // loop_pre_header
      _
    $region3: #{tpu_custom_call.1} parent=1 // loop_header
      %s15 = sphi 0, %s19
      %p16 = scmp.ge.s32.totalorder %s15, 5
      %s23 = sphi 0, %s23
      %s25 = sphi 0, %s23
      %s26 = sphi 0, %s25
      %s40 = sphi 0, %s26
      %s46 = sphi 0, %s48
      %s49 = sphi 0, %s46
      %s50 = sphi 0, %s49
      %s66 = sphi 0, %s50
      %s72 = sphi 0, %s74
      %s75 = sphi 0, %s72
      %s76 = sphi 0, %s75
      %s92 = sphi 0, %s76
    $region4: #{tpu_custom_call.1} parent=1 // loop_header_branch
      %18 = sbr.rel (%p16) target = $region8
    $region5: #{tpu_custom_call.1} parent=1 // loop_body
      %s20 = ssub.s32 %s15, 1
      %s21 = ssub.s32 %s15, 2
      %s22 = sadd.s32 %s15, 1
      %s24 = sadd.s32 %s23, 1
      %p27 = scmp.eq.s32.totalorder %s15, 2
      %p28 = scmp.ne.s32.totalorder %s23, %s25
      %p29 = scmp.eq.s32.totalorder %s15, 0
      %p30 = por %p28, %p29
      %p31 = scmp.ne.s32.totalorder %s23, %s25
      %p32 = scmp.eq.s32.totalorder %s20, 2
      %p33 = por %p31, %p32
      %p34 = scmp.ne.s32.totalorder %s25, %s26
      %p35 = scmp.eq.s32.totalorder %s20, 0
      %p36 = por %p34, %p35
      %p37 = scmp.ne.s32.totalorder %s25, %s26
      %p38 = scmp.eq.s32.totalorder %s21, 2
      %p39 = por %p37, %p38
      %p41 = scmp.ne.s32.totalorder %s26, %s40
      %p42 = scmp.eq.s32.totalorder %s21, 0
      %p43 = por %p41, %p42
      %s44 = ssub.s32 %s15, %s22
      %p45 = scmp.eq.s32.totalorder %s44, 0
      %s47 = sadd.s32 %s46, 1
      %s48 = scalar_select %p45, %s46, %s47
      %p51 = pneg %p45
      %p52 = scmp.eq.s32.totalorder %s15, 2
      %p53 = por %p51, %p52
      %p54 = scmp.ne.s32.totalorder %s46, %s49
      %p55 = scmp.eq.s32.totalorder %s15, 0
      %p56 = por %p54, %p55
      %p57 = scmp.ne.s32.totalorder %s46, %s49
      %p58 = scmp.eq.s32.totalorder %s20, 2
      %p59 = por %p57, %p58
      %p60 = scmp.ne.s32.totalorder %s49, %s50
      %p61 = scmp.eq.s32.totalorder %s20, 0
      %p62 = por %p60, %p61
      %p63 = scmp.ne.s32.totalorder %s49, %s50
      %p64 = scmp.eq.s32.totalorder %s21, 2
      %p65 = por %p63, %p64
      %p67 = scmp.ne.s32.totalorder %s50, %s66
      %p68 = scmp.eq.s32.totalorder %s21, 0
      %p69 = por %p67, %p68
      %s70 = ssub.s32 %s15, %s22
      %p71 = scmp.eq.s32.totalorder %s70, 0
      %s73 = sadd.s32 %s72, 1
      %s74 = scalar_select %p71, %s72, %s73
      %p77 = pneg %p71
      %p78 = scmp.eq.s32.totalorder %s15, 2
      %p79 = por %p77, %p78
      %p80 = scmp.ne.s32.totalorder %s72, %s75
      %p81 = scmp.eq.s32.totalorder %s15, 0
      %p82 = por %p80, %p81
      %p83 = scmp.ne.s32.totalorder %s72, %s75
      %p84 = scmp.eq.s32.totalorder %s20, 2
      %p85 = por %p83, %p84
      %p86 = scmp.ne.s32.totalorder %s75, %s76
      %p87 = scmp.eq.s32.totalorder %s20, 0
      %p88 = por %p86, %p87
      %p89 = scmp.ne.s32.totalorder %s75, %s76
      %p90 = scmp.eq.s32.totalorder %s21, 2
      %p91 = por %p89, %p90
      %p93 = scmp.ne.s32.totalorder %s76, %s92
      %p94 = scmp.eq.s32.totalorder %s21, 0
      %p95 = por %p93, %p94
      %p96 = scmp.le.s32.totalorder 1, %s15
      %p97 = scmp.lt.s32.totalorder %s15, 4
      %p98 = pnand %p96, %p97
      %p99 = pneg %p98
      // Predicated region
      $region9: #{tpu_custom_call.1} parent=5 // pred_check
        _
      $region10: #{tpu_custom_call.1} parent=5 // pred_check_branch
        %101 = sbr.rel (%p98) target = $region12
      $region11: #{tpu_custom_call.1} parent=5 // pred_region
        %s102 = ssub.s32 %s15, 1
        // Predicated region
        $region13: #{tpu_custom_call.1} parent=11 // pred_check
          %p103 = pneg %p36
        $region14: #{tpu_custom_call.1} parent=11 // pred_check_branch
          %105 = sbr.rel (%p103) target = $region16
        $region15: #{tpu_custom_call.1} parent=11 // pred_region
          _
        $region16: #{tpu_custom_call.1} parent=11 // pred_fallthru
          _
      $region12: #{tpu_custom_call.1} parent=5 // pred_fallthru
        _
      %p106 = scmp.lt.s32.totalorder %s15, 3
      // Predicated region
      $region17: #{tpu_custom_call.1} parent=5 // pred_check
        %p107 = pneg %p106
      $region18: #{tpu_custom_call.1} parent=5 // pred_check_branch
        %109 = sbr.rel (%p107) target = $region20
      $region19: #{tpu_custom_call.1} parent=5 // pred_region
        // Predicated region
        $region21: #{tpu_custom_call.1} parent=19 // pred_check
          %p110 = pneg %p56
        $region22: #{tpu_custom_call.1} parent=19 // pred_check_branch
          %112 = sbr.rel (%p110) target = $region24
        $region23: #{tpu_custom_call.1} parent=19 // pred_region
          %s113 = sand.u32 %s46, 1
          %s114 = scalar_lea.sflag [#allocation4], %s113
          %s115 = sand.u32 %s46, 1
          %s116 = smul.addr %s115, 96
          %s117 = scalar_lea.vmem [#allocation3], %s116
          %s118 = smul.u32 3, %s15
          %s120 = ssub.s32 1536, 1536
          %121 = vsyncadd %s114, %s120
          %s122 = smul.addr %s118, 4
          %s123 = smul.addr %s122, 128
          %s124 = scalar_lea.hbm %s1, %s123
          %s125 = sshll.u32 %s117, 4
          %s126 = int_to_ptr.vmem [resolvable:$true] %s125
          %131 = dma.hbm_to_vmem [thread:$0]  %s124, 1536, %s126, %s114, 512, 512, 32
        $region24: #{tpu_custom_call.1} parent=19 // pred_fallthru
          _
      $region20: #{tpu_custom_call.1} parent=5 // pred_fallthru
        _
      %p132 = scmp.le.s32.totalorder 1, %s15
      %p133 = scmp.lt.s32.totalorder %s15, 4
      %p134 = pnand %p132, %p133
      %p135 = pneg %p134
      // Predicated region
      $region25: #{tpu_custom_call.1} parent=5 // pred_check
        _
      $region26: #{tpu_custom_call.1} parent=5 // pred_check_branch
        %137 = sbr.rel (%p134) target = $region28
      $region27: #{tpu_custom_call.1} parent=5 // pred_region
        %s138 = ssub.s32 %s15, 1
        %s139 = sand.u32 %s49, 1
        %s140 = scalar_lea.sflag [#allocation4], %s139
        %s141 = sand.u32 %s49, 1
        %s142 = smul.addr %s141, 96
        %s143 = scalar_lea.vmem [#allocation3], %s142
        // Predicated region
        $region29: #{tpu_custom_call.1} parent=27 // pred_check
          %p144 = pneg %p62
        $region30: #{tpu_custom_call.1} parent=27 // pred_check_branch
          %146 = sbr.rel (%p144) target = $region32
        $region31: #{tpu_custom_call.1} parent=27 // pred_region
          %147 = dma.done %s140, 1536
        $region32: #{tpu_custom_call.1} parent=27 // pred_fallthru
          _
        %p148 = pneg %p36
        %p149 = pneg %p33
        %s150 = sand.u32 %s49, 1
        %s151 = scalar_lea.sflag [#allocation4], %s150
        %s152 = sand.u32 %s49, 1
        %s153 = smul.addr %s152, 96
        %s154 = scalar_lea.vmem [#allocation3], %s153
        %p155 = pneg %p62
        %p156 = pneg %p59
        %p157 = pneg %p88
        %p158 = pneg %p85
        %s159 = sand.u32 %s75, 1
        %s160 = scalar_lea.sflag [#allocation5], %s159
        %s161 = sand.u32 %s75, 1
        %s162 = smul.addr %s161, 96
        %s163 = scalar_lea.vmem [#allocation6], %s162
        %s164 = smul.u32 3, %s20
        %s165 = smul.u32 3, %s20
        %s166 = sld [smem:[#allocation2]]
        %v167 = vld [vmem:[%s143] sm:$0xff]
        %v168 = vld [vmem:[%s143 + $0x8] sm:$0xff]
        %v169 = vld [vmem:[%s143 + $0x10] sm:$0xff]
        %v170 = vld [vmem:[%s143 + $0x18] sm:$0xff]
        %v171 = vld [vmem:[%s143 + $0x20] sm:$0xff]
        %v172 = vld [vmem:[%s143 + $0x28] sm:$0xff]
        %v173 = vld [vmem:[%s143 + $0x30] sm:$0xff]
        %v174 = vld [vmem:[%s143 + $0x38] sm:$0xff]
        %v175 = vld [vmem:[%s143 + $0x40] sm:$0xff]
        %v176 = vld [vmem:[%s143 + $0x48] sm:$0xff]
        %v177 = vld [vmem:[%s143 + $0x50] sm:$0xff]
        %v178 = vld [vmem:[%s143 + $0x58] sm:$0xff]
        %v179 = vstv %s166
        %v180 = vmul.f32 %v167, %v179
        %v181 = vmul.f32 %v168, %v179
        %v182 = vmul.f32 %v169, %v179
        %v183 = vmul.f32 %v170, %v179
        %v184 = vmul.f32 %v171, %v179
        %v185 = vmul.f32 %v172, %v179
        %v186 = vmul.f32 %v173, %v179
        %v187 = vmul.f32 %v174, %v179
        %v188 = vmul.f32 %v175, %v179
        %v189 = vmul.f32 %v176, %v179
        %v190 = vmul.f32 %v177, %v179
        %v191 = vmul.f32 %v178, %v179
        %192 = vst [vmem:[%s163] sm:$0xff] %v180
        %193 = vst [vmem:[%s163 + $0x8] sm:$0xff] %v181
        %194 = vst [vmem:[%s163 + $0x10] sm:$0xff] %v182
        %195 = vst [vmem:[%s163 + $0x18] sm:$0xff] %v183
        %196 = vst [vmem:[%s163 + $0x20] sm:$0xff] %v184
        %197 = vst [vmem:[%s163 + $0x28] sm:$0xff] %v185
        %198 = vst [vmem:[%s163 + $0x30] sm:$0xff] %v186
        %199 = vst [vmem:[%s163 + $0x38] sm:$0xff] %v187
        %200 = vst [vmem:[%s163 + $0x40] sm:$0xff] %v188
        %201 = vst [vmem:[%s163 + $0x48] sm:$0xff] %v189
        %202 = vst [vmem:[%s163 + $0x50] sm:$0xff] %v190
        %203 = vst [vmem:[%s163 + $0x58] sm:$0xff] %v191
        %s204 = sand.u32 %s75, 1
        %s205 = scalar_lea.sflag [#allocation5], %s204
        %s206 = sand.u32 %s75, 1
        %s207 = smul.addr %s206, 96
        %s208 = scalar_lea.vmem [#allocation6], %s207
        // Predicated region
        $region33: #{tpu_custom_call.1} parent=27 // pred_check
          %p209 = pneg %p85
        $region34: #{tpu_custom_call.1} parent=27 // pred_check_branch
          %211 = sbr.rel (%p209) target = $region36
        $region35: #{tpu_custom_call.1} parent=27 // pred_region
          %s212 = smul.u32 3, %s20
          %s214 = ssub.s32 1536, 1536
          %215 = vsyncadd %s205, %s214
          %s216 = smul.addr %s212, 4
          %s217 = smul.addr %s216, 128
          %s218 = scalar_lea.hbm %s2, %s217
          %s219 = sshll.u32 %s208, 4
          %s220 = int_to_ptr.vmem [resolvable:$true] %s219
          %225 = dma.vmem_to_hbm [thread:$0]  %s220, 1536, %s218, %s205, 512, 512, 32
        $region36: #{tpu_custom_call.1} parent=27 // pred_fallthru
          _
      $region28: #{tpu_custom_call.1} parent=5 // pred_fallthru
        _
      %p226 = scmp.le.s32.totalorder 2, %s15
      // Predicated region
      $region37: #{tpu_custom_call.1} parent=5 // pred_check
        %p227 = pneg %p226
      $region38: #{tpu_custom_call.1} parent=5 // pred_check_branch
        %229 = sbr.rel (%p227) target = $region40
      $region39: #{tpu_custom_call.1} parent=5 // pred_region
        %s230 = ssub.s32 %s15, 2
        // Predicated region
        $region41: #{tpu_custom_call.1} parent=39 // pred_check
          %p231 = pneg %p91
        $region42: #{tpu_custom_call.1} parent=39 // pred_check_branch
          %233 = sbr.rel (%p231) target = $region44
        $region43: #{tpu_custom_call.1} parent=39 // pred_region
          %s234 = sand.u32 %s76, 1
          %s235 = scalar_lea.sflag [#allocation5], %s234
          %s236 = sand.u32 %s76, 1
          %s237 = smul.addr %s236, 96
          %s238 = scalar_lea.vmem [#allocation6], %s237
          %239 = dma.done %s235, 1536
        $region44: #{tpu_custom_call.1} parent=39 // pred_fallthru
          _
      $region40: #{tpu_custom_call.1} parent=5 // pred_fallthru
        _
    $region6: #{tpu_custom_call.1} parent=1 // loop_footer
      %s19 = sadd.s32 1, %s15
    $region7: #{tpu_custom_call.1} parent=1 // loop_footer_branch
      %14 = sbr.rel target = $region3
    $region8: #{tpu_custom_call.1} parent=1 // loop_exit
      _
    %240 = vsyncpa [#allocation4], 1
    %s241 = scalar_lea.sflag [#allocation4], 1
    %242 = vsyncpa %s241, 1
    %243 = vsyncpa [#allocation5], 1
    %s244 = scalar_lea.sflag [#allocation5], 1
    %245 = vsyncpa %s244, 1

</llo_original>
